<compile_context>
chip_gen: v7x
topology: tpu7x:2x2x1
jax: 0.10.0
libtpu: 0.0.40
codegen_flags: <defaults>
</compile_context>

<pallas_src>
import functools
import math

import jax
import jax.numpy as jnp
from jax.experimental import pallas as pl
from jax.experimental.pallas import tpu as pltpu


# ----------------------------------------------------------------------------
# VMEM budgeting (generation-aware: v5e/v6e 128 MiB physical, v7x 64 MiB).
# ----------------------------------------------------------------------------
@functools.lru_cache(maxsize=None)
def _vmem_limit_bytes():
    cap = 64 << 20                          # conservative default (v7x per-TC)
    try:
        cap = int(getattr(pltpu.get_tpu_info(), "vmem_capacity_bytes", cap) or cap)
    except Exception:
        pass
    if cap < (16 << 20):
        cap = 64 << 20
    # Leave headroom for compiler-internal scratch; 64 MiB is safe on every
    # generation and well above the 16/32 MiB scoped defaults.
    return max(32 << 20, min((cap * 3) // 4, 64 << 20))


def _working_set_budget():
    return _vmem_limit_bytes() // 2


def _round_up(x, m):
    return ((x + m - 1) // m) * m


def _divisors_desc(n):
    return [d for d in range(n, 0, -1) if n % d == 0]


# ----------------------------------------------------------------------------
# Tiled projection matmul:  out[M, N] = x[M, K] @ w[K, N]   (f32 accumulate)
# ----------------------------------------------------------------------------
def _matmul_resident_kernel(x_ref, w_ref, o_ref):
    # Full (K, N) weight is VMEM-resident; one streaming pass over rows of x.
    o_ref[...] = jnp.dot(x_ref[...], w_ref[...],
                         preferred_element_type=jnp.float32).astype(o_ref.dtype)


def _matmul_acc_kernel(x_ref, w_ref, o_ref, acc_ref):
    @pl.when(pl.program_id(2) == 0)
    def _():
        acc_ref[...] = jnp.zeros_like(acc_ref)

    acc_ref[...] += jnp.dot(x_ref[...], w_ref[...],
                            preferred_element_type=jnp.float32)

    @pl.when(pl.program_id(2) == pl.num_programs(2) - 1)
    def _():
        o_ref[...] = acc_ref[...].astype(o_ref.dtype)


def _choose_tile(dim, preferred=(512, 256, 128)):
    for t in preferred:
        if dim % t == 0:
            return t
    return dim


def matmul_tiled(x, w, out_dtype=jnp.float32):
    """x: (M, K), w: (K, N) already transposed to (in, out)."""
    M, K = x.shape
    K2, N = w.shape
    assert K == K2
    x_item = jnp.dtype(x.dtype).itemsize
    w_item = jnp.dtype(w.dtype).itemsize
    o_item = jnp.dtype(out_dtype).itemsize
    budget = _working_set_budget()
    limit = _vmem_limit_bytes()

    # Row (M) tile: pad M to an aligned tile instead of one giant unaligned
    # block (review: the old fallback collapsed the grid / blew up VMEM).
    if M >= 128:
        tm = next(t for t in (512, 256, 128) if M >= t)
    else:
        tm = _round_up(M, 8)
    Mp = _round_up(M, tm)
    x_p = x if Mp == M else jnp.pad(x, ((0, Mp - M), (0, 0)))

    cost = pl.CostEstimate(
        flops=2 * M * N * K, transcendentals=0,
        bytes_accessed=x_item * M * K + w_item * K * N + o_item * M * N)

    resident_bytes = (2 * K * N * w_item          # weight (counted double-buffered)
                      + 2 * tm * K * x_item       # x tile, double-buffered
                      + 2 * tm * N * o_item       # out tile, double-buffered
                      + tm * N * 4)               # f32 matmul result
    if resident_bytes <= budget:
        out = pl.pallas_call(
            _matmul_resident_kernel,
            out_shape=jax.ShapeDtypeStruct((Mp, N), out_dtype),
            grid=(Mp // tm,),
            in_specs=[pl.BlockSpec((tm, K), lambda i: (i, 0)),
                      pl.BlockSpec((K, N), lambda i: (0, 0))],
            out_specs=pl.BlockSpec((tm, N), lambda i: (i, 0)),
            compiler_params=pltpu.CompilerParams(
                dimension_semantics=("parallel",),
                vmem_limit_bytes=limit),
            cost_estimate=cost,
        )(x_p, w)
    else:
        tn = _choose_tile(N)
        tk = _choose_tile(K)
        out = pl.pallas_call(
            _matmul_acc_kernel,
            out_shape=jax.ShapeDtypeStruct((Mp, N), out_dtype),
            grid_spec=pltpu.PrefetchScalarGridSpec(
                num_scalar_prefetch=0,
                grid=(Mp // tm, N // tn, K // tk),
                in_specs=[pl.BlockSpec((tm, tk), lambda i, j, k: (i, k)),
                          pl.BlockSpec((tk, tn), lambda i, j, k: (k, j))],
                out_specs=pl.BlockSpec((tm, tn), lambda i, j, k: (i, j)),
                scratch_shapes=[pltpu.VMEM((tm, tn), jnp.float32)]),
            compiler_params=pltpu.CompilerParams(
                dimension_semantics=("parallel", "parallel", "arbitrary"),
                vmem_limit_bytes=limit),
            cost_estimate=cost,
        )(x_p, w)
    return out if Mp == M else out[:M]


# ----------------------------------------------------------------------------
# Fused multi-head attention (heads handled in-kernel, lane-dense output)
# ----------------------------------------------------------------------------
def _mha_heads_body(q_src, k_src, v_src, q_off, k_off, v_off,
                    num_heads, head_dim, scale, out_dtype):
    """Per-head attention over column-packed heads.

    q_src: (tq, *), k_src/v_src: (Sk, *); head h lives in columns
    [off + h*dh : off + (h+1)*dh].  Returns (tq, num_heads*head_dim) in the
    merged (transpose_output) layout — a single lane-dense store."""
    outs = []
    for h in range(num_heads):
        a, b = h * head_dim, (h + 1) * head_dim
        q_h = q_src[:, q_off + a:q_off + b] * scale          # scale folded into q
        k_h = k_src[:, k_off + a:k_off + b]
        v_h = v_src[:, v_off + a:v_off + b]
        # QK^T contracting on head_dim directly (no in-kernel K transpose).
        s = jax.lax.dot_general(q_h, k_h, (((1,), (1,)), ((), ())),
                                preferred_element_type=jnp.float32)   # (tq, Sk)
        m = jnp.max(s, axis=-1, keepdims=True)
        p = jnp.exp(s - m)                                            # f32 softmax
        l = jnp.sum(p, axis=-1, keepdims=True)
        o_h = jnp.dot(p.astype(v_h.dtype), v_h,
                      preferred_element_type=jnp.float32)             # (tq, dh)
        outs.append(o_h / l)         # deferred, exact normalization on (tq, dh)
    return jnp.concatenate(outs, axis=-1).astype(out_dtype)          # (tq, D)


def _choose_query_tile(seq_len, batch, footprint, budget):
    """Largest divisor of seq_len whose working set fits `budget`, floored at
    min(seq_len, 128) query rows per step (MXU fill / per-step overhead)."""
    floor = min(seq_len, 128)
    best = seq_len
    for t in _divisors_desc(seq_len):
        if t < floor:
            break
        if t != seq_len and t % 8 != 0:
            continue
        best = t
        if footprint(t) <= budget:
            break
    tq = best
    # v7x megacore: keep >=2 steps on a parallel grid axis when batch alone
    # does not provide them.
    if batch * (seq_len // tq) < 2:
        for t in _divisors_desc(seq_len):
            if t < tq and t >= 128 and t % 8 == 0 and footprint(t) <= budget:
                tq = t
                break
    # TODO(synk): if even the floor tile exceeds budget, flash-style Sk tiling
    #             (online softmax over a third grid axis) is required.
    return tq


def attention_fused_qkv(qkv, num_heads, compute_dtype):
    """Self-attention over a fused (B, S, 3D) projection slab.

    Head split, softmax, PV and head merge all happen inside the kernel; the
    output is (B, S, D) already in the merged (transpose_output) layout."""
    B, S, D3 = qkv.shape
    D = D3 // 3
    dh = D // num_heads
    scale = 1.0 / math.sqrt(dh)
    item = jnp.dtype(compute_dtype).itemsize
    budget = _working_set_budget()
    limit = _vmem_limit_bytes()

    def footprint(tq):
        slab = 2 * S * D3 * item                      # resident q/k/v source slab
        qblk = 0 if tq == S else 2 * tq * D3 * item
        oblk = 2 * tq * D * item
        scratch = 3 * tq * S * 4 + 2 * tq * D * 4     # f32 scores + temporaries
        return slab + qblk + oblk + scratch

    tq = _choose_query_tile(S, B, footprint, budget)

    cost = pl.CostEstimate(
        flops=4 * B * num_heads * S * S * dh,
        transcendentals=B * num_heads * S * S,
        bytes_accessed=item * (B * S * D3 + B * S * D))
    params = pltpu.CompilerParams(
        dimension_semantics=("parallel",) if tq == S else ("parallel", "parallel"),
        vmem_limit_bytes=limit)

    if tq == S:
        # One (1, S, 3D) slab block per batch provides q, k and v.
        def kernel(qkv_ref, o_ref):
            x = qkv_ref[0]
            o_ref[0] = _mha_heads_body(x, x, x, 0, D, 2 * D,
                                       num_heads, dh, scale, o_ref.dtype)

        return pl.pallas_call(
            kernel,
            out_shape=jax.ShapeDtypeStruct((B, S, D), compute_dtype),
            grid=(B,),
            in_specs=[pl.BlockSpec((1, S, D3), lambda b: (b, 0, 0))],
            out_specs=pl.BlockSpec((1, S, D), lambda b: (b, 0, 0)),
            compiler_params=params, cost_estimate=cost,
        )(qkv)

    # Query-tiled variant: q rows from a (1, tq, 3D) block, k/v from the full
    # (1, S, 3D) slab (its block index is constant in i, so it is not re-DMA'd).
    def kernel(q_ref, kv_ref, o_ref):
        kv = kv_ref[0]
        o_ref[0] = _mha_heads_body(q_ref[0], kv, kv, 0, D, 2 * D,
                                   num_heads, dh, scale, o_ref.dtype)

    return pl.pallas_call(
        kernel,
        out_shape=jax.ShapeDtypeStruct((B, S, D), compute_dtype),
        grid=(B, S // tq),
        in_specs=[pl.BlockSpec((1, tq, D3), lambda b, i: (b, i, 0)),
                  pl.BlockSpec((1, S, D3), lambda b, i: (b, 0, 0))],
        out_specs=pl.BlockSpec((1, tq, D), lambda b, i: (b, i, 0)),
        compiler_params=params, cost_estimate=cost,
    )(qkv, qkv)


def attention_split(q, k, v, num_heads, compute_dtype):
    """Attention with separate (B, Sq, D) / (B, Sk, D) q / k / v projections."""
    B, Sq, D = q.shape
    Sk = k.shape[1]
    dh = D // num_heads
    scale = 1.0 / math.sqrt(dh)
    item = jnp.dtype(compute_dtype).itemsize
    budget = _working_set_budget()
    limit = _vmem_limit_bytes()

    def footprint(tq):
        return (2 * tq * D * item                  # q block
                + 4 * Sk * D * item                # k + v blocks (double-buffered)
                + 2 * tq * D * item                # out block
                + 3 * tq * Sk * 4 + 2 * tq * D * 4)  # f32 scores + temporaries

    tq = _choose_query_tile(Sq, B, footprint, budget)

    def kernel(q_ref, k_ref, v_ref, o_ref):
        o_ref[0] = _mha_heads_body(q_ref[0], k_ref[0], v_ref[0], 0, 0, 0,
                                   num_heads, dh, scale, o_ref.dtype)

    cost = pl.CostEstimate(
        flops=4 * B * num_heads * Sq * Sk * dh,
        transcendentals=B * num_heads * Sq * Sk,
        bytes_accessed=item * (2 * B * Sq * D + 2 * B * Sk * D))
    return pl.pallas_call(
        kernel,
        out_shape=jax.ShapeDtypeStruct((B, Sq, D), compute_dtype),
        grid=(B, Sq // tq),
        in_specs=[pl.BlockSpec((1, tq, D), lambda b, i: (b, i, 0)),
                  pl.BlockSpec((1, Sk, D), lambda b, i: (b, 0, 0)),
                  pl.BlockSpec((1, Sk, D), lambda b, i: (b, 0, 0))],
        out_specs=pl.BlockSpec((1, tq, D), lambda b, i: (b, i, 0)),
        compiler_params=pltpu.CompilerParams(
            dimension_semantics=("parallel", "parallel"),
            vmem_limit_bytes=limit),
        cost_estimate=cost,
    )(q, k, v)


# ----------------------------------------------------------------------------
# Module: MultiHeadAttentionParrallel
# ----------------------------------------------------------------------------
class MultiHeadAttentionParrallel:
    def __init__(self, num_heads, embed_dim, qkv_transform_dim=None,
                 dropout=0.2, bias=False, compute_dtype=jnp.bfloat16,
                 key=jax.random.PRNGKey(0)):
        assert not bias
        self.num_heads = num_heads
        if qkv_transform_dim is None:
            qkv_transform_dim = embed_dim
        assert qkv_transform_dim % num_heads == 0
        self.embed_dim = embed_dim
        self.qkv_transform_dim = qkv_transform_dim
        self.compute_dtype = compute_dtype

        kq, kk, kv, ko = jax.random.split(key, 4)

        # Deterministic init mimicking torch.nn.Linear: U(-1/sqrt(in), 1/sqrt(in)).
        def init(k, out_f, in_f):
            bound = 1.0 / math.sqrt(in_f)
            return jax.random.uniform(k, (out_f, in_f), jnp.float32,
                                      minval=-bound, maxval=bound)

        # f32 master weights in PyTorch (out, in) layout (used by the reference).
        self.W_q = init(kq, qkv_transform_dim, embed_dim)
        self.W_k = init(kk, qkv_transform_dim, embed_dim)
        self.W_v = init(kv, qkv_transform_dim, embed_dim)
        self.W_o = init(ko, embed_dim, qkv_transform_dim)

        # Pre-transposed (in, out) compute-dtype weights (done ONCE), plus the
        # fused (E, 3D) QKV slab for the self-attention projection.
        cd = compute_dtype
        self.W_q_t = self.W_q.T.astype(cd)
        self.W_k_t = self.W_k.T.astype(cd)
        self.W_v_t = self.W_v.T.astype(cd)
        self.W_o_t = self.W_o.T.astype(cd)
        self.W_qkv_t = jnp.concatenate(
            [self.W_q_t, self.W_k_t, self.W_v_t], axis=1)      # (E, 3D)
        # TODO(synk): nn.Dropout treated as identity (eval-mode semantics).

    # --- helpers kept only for the pure-JAX reference path ------------------
    def _transpose_qkv(self, x):
        B, S, D = x.shape
        H = self.num_heads
        x = x.reshape(B, S, H, D // H)
        x = jnp.transpose(x, (0, 2, 1, 3))
        return x.reshape(B * H, S, D // H)

    def _transpose_output(self, x, B):
        H = self.num_heads
        BH, S, dh = x.shape
        x = x.reshape(B, H, S, dh)
        x = jnp.transpose(x, (0, 2, 1, 3))
        return x.reshape(B, S, H * dh)

    def __call__(self, queries, keys, values, valid_lens=None,
                 self_attention=None):
        assert valid_lens is None  # TODO(synk): sequence masking not implemented
        if self_attention is None:
            # NOTE: under jit tracing this identity check may be False even for
            # logically identical inputs; pass self_attention=True explicitly to
            # force the fused-QKV projection path (falls back correctly either way).
            self_attention = queries is keys and keys is values

        B, Sq, E = queries.shape
        Sk = keys.shape[1]
        D = self.qkv_transform_dim
        H = self.num_heads
        cd = self.compute_dtype

        if self_attention:
            # One fused projection with N = 3D, then the attention kernel reads
            # q/k/v and every head straight out of the slab (no XLA slicing).
            x2d = queries.reshape(B * Sq, E).astype(cd)
            qkv = matmul_tiled(x2d, self.W_qkv_t, out_dtype=cd)
            qkv = qkv.reshape(B, Sq, 3 * D)               # metadata-only reshape
            attn = attention_fused_qkv(qkv, H, cd)        # (B, Sq, D), heads merged
        else:
            q = matmul_tiled(queries.reshape(B * Sq, E).astype(cd),
                             self.W_q_t, out_dtype=cd).reshape(B, Sq, D)
            k = matmul_tiled(keys.reshape(B * Sk, E).astype(cd),
                             self.W_k_t, out_dtype=cd).reshape(B, Sk, D)
            v = matmul_tiled(values.reshape(B * Sk, E).astype(cd),
                             self.W_v_t, out_dtype=cd).reshape(B, Sk, D)
            attn = attention_split(q, k, v, H, cd)        # (B, Sq, D), heads merged

        out = matmul_tiled(attn.reshape(B * Sq, D), self.W_o_t,
                           out_dtype=jnp.float32)
        return out.reshape(B, Sq, E)


# ----------------------------------------------------------------------------
# Pure-JAX reference (always f32) for sanity check
# ----------------------------------------------------------------------------
def reference_forward(mha, queries, keys, values):
    B = queries.shape[0]
    q = mha._transpose_qkv(queries @ mha.W_q.T)
    k = mha._transpose_qkv(keys @ mha.W_k.T)
    v = mha._transpose_qkv(values @ mha.W_v.T)
    d = q.shape[-1]
    s = jnp.einsum("bqd,bkd->bqk", q, k) / math.sqrt(d)
    p = jax.nn.softmax(s, axis=-1)
    o = jnp.einsum("bqk,bkd->bqd", p, v)
    o = mha._transpose_output(o, B)
    return o @ mha.W_o.T


if __name__ == "__main__":
    key = jax.random.PRNGKey(0)
    k_in, k_mod = jax.random.split(key)

    B, S, E, H = 2, 8, 32, 4
    kq, kk, kv = jax.random.split(k_in, 3)
    queries = jax.random.normal(kq, (B, S, E), jnp.float32)
    keys = jax.random.normal(kk, (B, S, E), jnp.float32)
    values = jax.random.normal(kv, (B, S, E), jnp.float32)

    # ---- f32 MXU path, distinct q/k/v (split projections + split attention) ----
    mha_f32 = MultiHeadAttentionParrallel(num_heads=H, embed_dim=E,
                                          compute_dtype=jnp.float32, key=k_mod)
    out = jax.block_until_ready(mha_f32(queries, keys, values))
    ref = reference_forward(mha_f32, queries, keys, values)
    assert out.shape == (B, S, E), out.shape
    # Softmax normalization is now an exact division; tolerance covers the
    # generation-dependent MXU f32 matmul precision.
    assert jnp.allclose(out, ref, atol=1e-2, rtol=1e-2), \
        float(jnp.max(jnp.abs(out - ref)))

    # ---- f32 path, self-attention (fused (E,3D) projection + fused kernel) ----
    out_sa = jax.block_until_ready(mha_f32(queries, queries, queries))
    ref_sa = reference_forward(mha_f32, queries, queries, queries)
    assert jnp.allclose(out_sa, ref_sa, atol=1e-2, rtol=1e-2), \
        float(jnp.max(jnp.abs(out_sa - ref_sa)))

    # ---- bf16 MXU-input / f32-accumulate path (the default on all gens) ----
    mha_bf16 = MultiHeadAttentionParrallel(num_heads=H, embed_dim=E, key=k_mod)
    out_bf = jax.block_until_ready(
        mha_bf16(queries, queries, queries, self_attention=True))
    assert out_bf.shape == (B, S, E), out_bf.shape
    assert jnp.allclose(out_bf, ref_sa, atol=6e-2, rtol=6e-2), \
        float(jnp.max(jnp.abs(out_bf - ref_sa)))

    print("KERNEL_OK")
</pallas_src>

<mosaic_0001>
module attributes {stable_mosaic.version = 11 : i64} {
  func.func @_matmul_resident_kernel(%arg0: i32, %arg1: memref<16x32xf32, #tpu.memory_space<vmem>>, %arg2: memref<32x32xf32, #tpu.memory_space<vmem>>, %arg3: memref<16x32xf32, #tpu.memory_space<vmem>>) attributes {dimension_semantics = [#tpu.dimension_semantics<parallel>], iteration_bounds = array<i64: 1>, scalar_prefetch = 0 : i64, scratch_operands = 0 : i64, tpu.core_type = #tpu.core_type<tc>, window_params = [{transform_indices = @transform_0, window_bounds = array<i64: 16, 32>}, {pipeline_mode = #tpu.pipeline_mode<synchronous>, transform_indices = @transform_1, window_bounds = array<i64: 32, 32>}, {transform_indices = @transform_2, window_bounds = array<i64: 16, 32>}]} {
    %c0 = arith.constant 0 : index
    %c0_0 = arith.constant 0 : index
    %0 = vector.load %arg1[%c0, %c0_0] : memref<16x32xf32, #tpu.memory_space<vmem>>, vector<16x32xf32>
    %c0_1 = arith.constant 0 : index
    %c0_2 = arith.constant 0 : index
    %1 = vector.load %arg2[%c0_1, %c0_2] : memref<32x32xf32, #tpu.memory_space<vmem>>, vector<32x32xf32>
    %cst = arith.constant dense<0.000000e+00> : vector<16x32xf32>
    %2 = tpu.matmul %0, %1, %cst {dimension_numbers = #tpu.dot_dimension_numbers<[1], [0], [0], [1], [0, 0, 1, 1], [], []>} : vector<16x32xf32>, vector<32x32xf32>, vector<16x32xf32> -> vector<16x32xf32>
    %c0_3 = arith.constant 0 : index
    %c0_4 = arith.constant 0 : index
    %3 = vector.load %arg3[%c0_3, %c0_4] : memref<16x32xf32, #tpu.memory_space<vmem>>, vector<16x32xf32>
    tpu.vector_store %arg3[%c0_3, %c0_4], %2 {strides = array<i32>} : memref<16x32xf32, #tpu.memory_space<vmem>>, vector<16x32xf32>,
    return
  }
  func.func @transform_0(%arg0: i32) -> (i32, i32) {
    %c0_i32 = arith.constant 0 : i32
    %c0_i32_0 = arith.constant 0 : i32
    return %arg0, %c0_i32 : i32, i32
  }
  func.func @transform_1(%arg0: i32) -> (i32, i32) {
    %c0_i32 = arith.constant 0 : i32
    %c0_i32_0 = arith.constant 0 : i32
    %c0_i32_1 = arith.constant 0 : i32
    return %c0_i32, %c0_i32_0 : i32, i32
  }
  func.func @transform_2(%arg0: i32) -> (i32, i32) {
    %c0_i32 = arith.constant 0 : i32
    %c0_i32_0 = arith.constant 0 : i32
    return %arg0, %c0_i32 : i32, i32
  }
}

</mosaic_0001>

<llo_original>
// kernel: tpu_custom_call.1
$region0: #{tpu_custom_call.1}
  #allocation0 [shape = 'u32[]', space=smem, size = 0x4, offset = 0x4, fixed_abs, tag = 'smem constant byte address 0x4 - core index']
  #allocation1 [shape = 'u32[144,128]{1,0:T(1,128)}', space=vmem, size = 0x12000, scoped, tag = 'internal scratch']
  %s0 = inlined_call_operand.hbm [shape: f32[16,32], index: 0, kind: input, shape index: {}]
  %s1 = inlined_call_operand.hbm [shape: f32[32,32], index: 1, kind: input, shape index: {}]
  %s2 = inlined_call_operand.hbm [shape: f32[16,32], index: 2, kind: output, shape index: {}]
  %s3 = sld [smem:[#allocation0]]
  $region26: #{tpu_custom_call.1} parent=0
    _
  %s5 = ssub.s32 1, %s3
  %s6 = scalar_select 0, %s5, %s3
  $region1: #{tpu_custom_call.1} parent=0
    #allocation2 [shape = 'u8[8192]{0}', space=vmem, size = 0x2000, scoped, tag = 'input window, operand 0, single buffered']
    #allocation3 [shape = 's32[1]{0}', space=sflag, size = 0x4, scoped, tag = 'scoped memory for tpu_custom_call.1']
    #allocation4 [shape = 's32[1]{0}', space=sflag, size = 0x4, scoped, tag = 'scoped memory for tpu_custom_call.1']
    #allocation5 [shape = 'u8[16384]{0}', space=vmem, size = 0x4000, scoped, tag = 'input window, operand 1, single buffered']
    #allocation6 [shape = 's32[1]{0}', space=sflag, size = 0x4, scoped, tag = 'scoped memory for tpu_custom_call.1']
    #allocation7 [shape = 'u8[8192]{0}', space=vmem, size = 0x2000, scoped, tag = 'output window, operand 0, single buffered']
    %7 = vsyncpa [#allocation3], 0
    %8 = vsyncpa [#allocation6], 0
    %9 = vsyncpa [#allocation4], 0
    // Predicated region
    $region2: #{tpu_custom_call.1} parent=1 // pred_check
      _
    $region3: #{tpu_custom_call.1} parent=1 // pred_check_branch
      %11 = sbr.rel (0) target = $region5
    $region4: #{tpu_custom_call.1} parent=1 // pred_region
      %s13 = ssub.s32 256, 256
      %14 = vsyncadd [#allocation3], %s13
      %s15 = sshll.u32 [#allocation2], 4
      %s16 = int_to_ptr.vmem [resolvable:$true] %s15
      %21 = dma.hbm_to_vmem [thread:$0]  %s0, 256, %s16, [#allocation3], 128, 128, 8
    $region5: #{tpu_custom_call.1} parent=1 // pred_fallthru
      _
    // Predicated region
    $region6: #{tpu_custom_call.1} parent=1 // pred_check
      _
    $region7: #{tpu_custom_call.1} parent=1 // pred_check_branch
      %23 = sbr.rel (0) target = $region9
    $region8: #{tpu_custom_call.1} parent=1 // pred_region
      %s25 = ssub.s32 512, 512
      %26 = vsyncadd [#allocation6], %s25
      %s27 = sshll.u32 [#allocation5], 4
      %s28 = int_to_ptr.vmem [resolvable:$true] %s27
      %33 = dma.hbm_to_vmem [thread:$0]  %s1, 512, %s28, [#allocation6], 128, 128, 8
    $region9: #{tpu_custom_call.1} parent=1 // pred_fallthru
      _
    // Predicated region
    $region10: #{tpu_custom_call.1} parent=1 // pred_check
      _
    $region11: #{tpu_custom_call.1} parent=1 // pred_check_branch
      %35 = sbr.rel (0) target = $region13
    $region12: #{tpu_custom_call.1} parent=1 // pred_region
      %36 = dma.done [#allocation3], 256
    $region13: #{tpu_custom_call.1} parent=1 // pred_fallthru
      _
    // Predicated region
    $region14: #{tpu_custom_call.1} parent=1 // pred_check
      _
    $region15: #{tpu_custom_call.1} parent=1 // pred_check_branch
      %38 = sbr.rel (0) target = $region17
    $region16: #{tpu_custom_call.1} parent=1 // pred_region
      %39 = dma.done [#allocation6], 512
    $region17: #{tpu_custom_call.1} parent=1 // pred_fallthru
      _
    %v40 = vld [vmem:[#allocation2] sm:$0xff]
    %v41 = vld [vmem:[#allocation2 + $0x8] sm:$0xff]
    %v42 = vld [vmem:[#allocation5] sm:$0xff]
    %v43 = vld [vmem:[#allocation5 + $0x8] sm:$0xff]
    %v44 = vld [vmem:[#allocation5 + $0x10] sm:$0xff]
    %v45 = vld [vmem:[#allocation5 + $0x18] sm:$0xff]
    %vm46 = vcmask 261120
    %v48 = vsel %vm46, %v40, 0
    %v51 = vsel %vm46, %v41, 0
    %53 = vmatprep.subr.mxu0 0.0
    %54 = vmatpush1.msra.mxu0 %v42
    %55 = vmatprep.subr.mxu0 0.0
    %56 = vmatpush1.msra.mxu0 %v43
    %57 = vmatprep.subr.mxu0 0.0
    %58 = vmatpush1.msra.mxu0 %v44
    %59 = vmatprep.subr.mxu0 0.0
    %60 = vmatpush1.msra.mxu0 %v45
    %61 = vmatprep.subr.mxu0 0.0
    %62 = vmatpush1.msra.mxu0 0.0
    %63 = vmatprep.subr.mxu0 0.0
    %64 = vmatpush1.msra.mxu0 0.0
    %65 = vmatprep.subr.mxu0 0.0
    %66 = vmatpush1.msra.mxu0 0.0
    %67 = vmatprep.subr.mxu0 0.0
    %68 = vmatpush1.msra.mxu0 0.0
    %69 = vmatprep.subr.mxu0 0.0
    %70 = vmatpush1.msra.mxu0 0.0
    %71 = vmatprep.subr.mxu0 0.0
    %72 = vmatpush1.msra.mxu0 0.0
    %73 = vmatprep.subr.mxu0 0.0
    %74 = vmatpush1.msra.mxu0 0.0
    %75 = vmatprep.subr.mxu0 0.0
    %76 = vmatpush1.msra.mxu0 0.0
    %77 = vmatprep.subr.mxu0 0.0
    %78 = vmatpush1.msra.mxu0 0.0
    %79 = vmatprep.subr.mxu0 0.0
    %80 = vmatpush1.msra.mxu0 0.0
    %81 = vmatprep.subr.mxu0 0.0
    %82 = vmatpush1.msra.mxu0 0.0
    %83 = vmatprep.subr.mxu0 0.0
    %84 = vmatpush1.msra.mxu0 0.0
    %85 = vmatprep.subr.mxu0 0.0
    %86 = vmatpush1.msra.mxu0 0.0
    %87 = vmatprep.subr.mxu0 0.0
    %88 = vmatpush1.msra.mxu0 0.0
    %89 = vmatprep.subr.mxu0 0.0
    %90 = vmatpush1.msra.mxu0 0.0
    %91 = vmatprep.subr.mxu0 0.0
    %92 = vmatpush1.msra.mxu0 0.0
    %93 = vmatprep.subr.mxu0 0.0
    %94 = vmatpush1.msra.mxu0 0.0
    %95 = vmatprep.subr.mxu0 0.0
    %96 = vmatpush1.msra.mxu0 0.0
    %97 = vmatprep.subr.mxu0 0.0
    %98 = vmatpush1.msra.mxu0 0.0
    %99 = vmatprep.subr.mxu0 0.0
    %100 = vmatpush1.msra.mxu0 0.0
    %101 = vmatprep.subr.mxu0 0.0
    %102 = vmatpush1.msra.mxu0 0.0
    %103 = vmatprep.subr.mxu0 0.0
    %104 = vmatpush1.msra.mxu0 0.0
    %105 = vmatprep.subr.mxu0 0.0
    %106 = vmatpush1.msra.mxu0 0.0
    %107 = vmatprep.subr.mxu0 0.0
    %108 = vmatpush1.msra.mxu0 0.0
    %109 = vmatprep.subr.mxu0 0.0
    %110 = vmatpush1.msra.mxu0 0.0
    %111 = vmatprep.subr.mxu0 0.0
    %112 = vmatpush1.msra.mxu0 0.0
    %113 = vmatprep.subr.mxu0 0.0
    %114 = vmatpush1.msra.mxu0 0.0
    %115 = vmatprep.subr.mxu0 0.0
    %116 = vmatpush1.msra.mxu0 0.0
    %117 = vmatprep.mubr.f32.mxu0 0.0
    %118 = vmatmul.mubr.f32.gmra.mrb[0].mxu0 %v48
    %v119 = vpop.f32.mrb[0].mxu0
    %v120 = vadd.f32 0.0, %v119
    %v121 = vpop.f32.mrb[0].mxu0
    %122 = vmatprep.mubr.f32.mxu0 0.0
    %123 = vmatmul.mubr.f32.gmra.mrb[0].mxu0 %v51
    %v124 = vpop.f32.mrb[0].mxu0
    %v125 = vadd.f32 0.0, %v124
    %v126 = vpop.f32.mrb[0].mxu0
    %127 = vdwg.mxu0
    %128 = vst.msk [vmem:[#allocation7] sm:$0xff] %vm46, %v120
    %129 = vst.msk [vmem:[#allocation7 + $0x8] sm:$0xff] %vm46, %v125
    // Predicated region
    $region18: #{tpu_custom_call.1} parent=1 // pred_check
      _
    $region19: #{tpu_custom_call.1} parent=1 // pred_check_branch
      %131 = sbr.rel (0) target = $region21
    $region20: #{tpu_custom_call.1} parent=1 // pred_region
      %s133 = ssub.s32 256, 256
      %134 = vsyncadd [#allocation4], %s133
      %s135 = sshll.u32 [#allocation7], 4
      %s136 = int_to_ptr.vmem [resolvable:$true] %s135
      %141 = dma.vmem_to_hbm [thread:$0]  %s136, 256, %s2, [#allocation4], 128, 128, 8
    $region21: #{tpu_custom_call.1} parent=1 // pred_fallthru
      _
    // Predicated region
    $region22: #{tpu_custom_call.1} parent=1 // pred_check
      _
    $region23: #{tpu_custom_call.1} parent=1 // pred_check_branch
      %143 = sbr.rel (0) target = $region25
    $region24: #{tpu_custom_call.1} parent=1 // pred_region
      %144 = dma.done [#allocation4], 256
    $region25: #{tpu_custom_call.1} parent=1 // pred_fallthru
      _
    %145 = vsyncpa [#allocation3], 1
    %146 = vsyncpa [#allocation6], 1
    %147 = vsyncpa [#allocation4], 1

</llo_original>
